<compile_context>
chip_gen: v6e
topology: v6e:2x2x1
jax: 0.10.0
libtpu: 0.0.40
codegen_flags: <defaults>
</compile_context>

<pallas_src>
import math

import jax
import jax.numpy as jnp
from jax.experimental import pallas as pl
from jax.experimental.pallas import tpu as pltpu


def _cdiv(a: int, b: int) -> int:
    return -(-a // b)


def _pad_lane(n: int) -> int:          # VMEM lane padding (last dim)
    return _cdiv(n, 128) * 128


def _pad_sub(n: int) -> int:           # VMEM sublane padding (second-to-last dim)
    return _cdiv(n, 8) * 8


def sinusoidal_pe(num_patches: int, d_model: int) -> jnp.ndarray:
    """Standard PositionalEmbedding table, shape (num_patches, d_model), f32."""
    position = jnp.arange(num_patches, dtype=jnp.float32)[:, None]
    div_term = jnp.exp(
        jnp.arange(0, d_model, 2, dtype=jnp.float32) * -(math.log(10000.0) / d_model)
    )
    pe = jnp.zeros((num_patches, d_model), dtype=jnp.float32)
    pe = pe.at[:, 0::2].set(jnp.sin(position * div_term))
    pe = pe.at[:, 1::2].set(jnp.cos(position * div_term))
    return pe


def _en_embedding_kernel(x_ref, w_ref, pe_ref, o_ref):
    # x_ref : (TM, K)  activation rows in their NATIVE dtype (cast in-kernel: free VPU op)
    # w_ref : (K,  N)  bf16 block-diagonal weight, already (K, N) -> plain A @ B on the MXU
    # pe_ref: (1, N) or (TM, N) f32 positional embedding (grid-invariant)
    # o_ref : (TM, N)
    x = x_ref[...].astype(w_ref.dtype)
    y = jnp.dot(x, w_ref[...], preferred_element_type=jnp.float32)   # f32 accumulation
    o_ref[...] = (y + pe_ref[...]).astype(o_ref.dtype)               # PE add in f32, then narrow


def _tpu_profile():
    """Generation-aware VMEM budget / tile targets (safe fallback if query fails)."""
    cap = 64 << 20
    try:
        info = pltpu.get_tpu_info()
        cap = int(getattr(info, "vmem_capacity_bytes", cap)) or cap
    except Exception:
        pass
    if cap >= (100 << 20):
        # v5e / v6e: 128 MiB physical VMEM, single TensorCore.
        return dict(vmem_budget=56 << 20, vmem_limit=100 << 20,
                    target_rows=4096, min_steps=1)
    # v7x-class: 64 MiB VMEM per core, 2 TensorCores -> keep >=2 grid steps if possible.
    return dict(vmem_budget=26 << 20, vmem_limit=48 << 20,
                target_rows=2048, min_steps=2)


def _choose_fold(P: int, D: int) -> int:
    """Smallest divisor g of P with g*D a multiple of 128 (lane-dense output, minimal
    FLOP inflation).  Falls back to 1 (masked stores, still correct)."""
    for g in range(1, min(P, 64) + 1):
        if P % g == 0 and (g * D) % 128 == 0:
            return g
    return 1


def _choose_tb(BN, rps, per_slice, fixed, vmem_budget, target_rows, min_steps):
    """How many (batch*var) slices to fuse per grid step (rps = matmul rows per slice)."""
    tb = min(BN,
             max(1, (vmem_budget - fixed) // max(per_slice, 1)),
             max(1, _cdiv(target_rows, rps)))
    if min_steps > 1:
        tb = min(tb, max(1, _cdiv(BN, min_steps)))   # >=2 steps for v7x's two TensorCores
    if tb >= BN:
        return BN                                    # single full block (always legal)
    # TM = tb*rps must be a multiple of 8 (prefer 16 for bf16 output tiling).
    for sub in (16, 8):
        step = sub // math.gcd(sub, rps)
        tb_r = (tb // step) * step
        if tb_r >= 1:
            return tb_r
    return min(BN, 8 // math.gcd(8, rps))            # smallest legal block


def en_embedding_forward(x, w_value, patch_len,
                         *, out_dtype=jnp.bfloat16, compute_dtype=jnp.bfloat16):
    """
    x        : (B, n_vars, seq_len), any float dtype (fed to the kernel natively)
    w_value  : (d_model, patch_len)  -- nn.Linear(patch_len, d_model, bias=False) weight
    returns  : (out of shape (B*n_vars, num_patches, d_model) in out_dtype, n_vars)

    NOTE: inputs/weight are rounded to bf16 for the MXU and the output is bf16 by default;
    this is an intentional deviation from the f32 PyTorch module (accumulation stays f32).
    """
    B, n_vars, seq_len = x.shape
    D, L = w_value.shape
    assert L == patch_len
    P = seq_len // patch_len
    assert P >= 1
    BN = B * n_vars

    # unfold(size=step=patch_len) == truncate remainder + reshape (contiguous -> free)
    x_p = x[:, :, : P * L]
    pe = sinusoidal_pe(P, D)                                   # (P, D) f32

    # Fold g patches into the lane axis so the output block is >=128 lanes wide.
    g = _choose_fold(P, D)
    G = P // g                                                 # patch-groups per slice
    K, N = g * L, g * D

    # Block-diagonal weight, built once on the host, already transposed to (K, N):
    #   w_arg[q*L + l, p*D + d] = delta(p, q) * W[d, l]
    wc = w_value.astype(compute_dtype)
    eye_g = jnp.eye(g, dtype=compute_dtype)
    w_arg = jnp.einsum("pq,dl->qlpd", eye_g, wc).reshape(K, N)

    # x stays in its native dtype in HBM; the bf16 cast happens inside the kernel.
    x2d = x_p.reshape(BN * G, K)

    prof = _tpu_profile()
    in_bytes = jnp.dtype(x.dtype).itemsize
    out_bytes = jnp.dtype(out_dtype).itemsize
    rps = G                                                    # matmul rows per slice
    # VMEM accounting uses lane-padded block sizes; pipelined blocks are charged x2.
    x_slice = rps * _pad_lane(K) * in_bytes
    o_slice = rps * _pad_lane(N) * out_bytes
    pe_slice = rps * _pad_lane(N) * 4 if G > 1 else 0
    tmp_slice = rps * (_pad_lane(N) * 4 + _pad_lane(K) * 2)    # f32 acc + bf16 cast temps (x1)
    per_slice = 2 * (x_slice + o_slice + pe_slice) + tmp_slice
    fixed = 2 * _pad_sub(K) * _pad_lane(N) * jnp.dtype(compute_dtype).itemsize
    if G == 1:
        fixed += 2 * _pad_sub(1) * _pad_lane(N) * 4            # single-row PE block

    tb = _choose_tb(BN, rps, per_slice, fixed,
                    prof["vmem_budget"], prof["target_rows"], prof["min_steps"])
    TM = tb * rps
    grid = _cdiv(BN, tb)            # ragged last block handled by Pallas (no host padding)

    pe_fold = pe.reshape(G, N)                                  # f32
    # G == 1: PE is one broadcast row (nearly-free sublane broadcast in-kernel).
    # G > 1 : PE genuinely varies per row within a block; tile it once (grid-invariant).
    pe_arg = pe_fold if G == 1 else jnp.tile(pe_fold, (tb, 1))

    out2d = pl.pallas_call(
        _en_embedding_kernel,
        out_shape=jax.ShapeDtypeStruct((BN * G, N), out_dtype),
        grid_spec=pltpu.PrefetchScalarGridSpec(
            num_scalar_prefetch=0,
            grid=(grid,),
            in_specs=[
                pl.BlockSpec((TM, K), lambda i: (i, 0)),        # native-dtype activations
                pl.BlockSpec((K, N), lambda i: (0, 0)),         # grid-invariant weight
                pl.BlockSpec(pe_arg.shape, lambda i: (0, 0)),   # grid-invariant PE
            ],
            out_specs=pl.BlockSpec((TM, N), lambda i: (i, 0)),
        ),
        compiler_params=pltpu.CompilerParams(
            dimension_semantics=("parallel",),                  # megacore-shardable grid axis
            vmem_limit_bytes=prof["vmem_limit"],
        ),
    )(x2d, w_arg, pe_arg)

    # (BN*G, g*D) row = (slice, patch-group), lanes = (patch-in-group, d):
    # a single contiguous reshape recovers (B*n_vars, P, D) -- no extra copy pass.
    out = out2d.reshape(BN, P, D)
    # dropout(p) is identity in forward/eval; glb_token is never used by forward().
    return out, n_vars


if __name__ == "__main__":
    # small shapes consistent with the module
    B, n_vars, seq_len = 2, 4, 64
    patch_len, d_model = 16, 32
    dropout_p = 0.1  # unused (eval-mode identity)
    num_patches = seq_len // patch_len

    key = jax.random.PRNGKey(0)
    k_x, k_w, k_g = jax.random.split(key, 3)

    x = jax.random.normal(k_x, (B, n_vars, seq_len), dtype=jnp.float32)
    # nn.Linear(patch_len, d_model, bias=False): weight shape (d_model, patch_len)
    w_value = jax.random.normal(k_w, (d_model, patch_len), dtype=jnp.float32) * 0.1
    # glb_token exists in __init__ but is not used in forward()
    glb_token = jax.random.normal(k_g, (1, n_vars, 1, d_model), dtype=jnp.float32)

    out, nv = en_embedding_forward(x, w_value, patch_len)
    out = jax.block_until_ready(out)

    # pure-JAX reference (matching the kernel's bf16 input/weight quantization; f32 accumulation)
    xq = x.astype(jnp.bfloat16).astype(jnp.float32)
    wq = w_value.astype(jnp.bfloat16).astype(jnp.float32)
    x_patches = xq[:, :, : num_patches * patch_len].reshape(
        B * n_vars, num_patches, patch_len)
    pe = sinusoidal_pe(num_patches, d_model)
    ref = jnp.einsum("bpl,dl->bpd", x_patches, wq) + pe[None, :, :]

    assert out.shape == (B * n_vars, num_patches, d_model)
    assert nv == n_vars
    max_err = float(jnp.max(jnp.abs(out.astype(jnp.float32) - ref)))
    assert max_err < 5e-2, f"max abs err {max_err}"

    print("KERNEL_OK")
</pallas_src>

<mosaic_0001>
module attributes {stable_mosaic.version = 11 : i64} {
  func.func @_en_embedding_kernel(%arg0: i32, %arg1: memref<8x64xf32, #tpu.memory_space<vmem>>, %arg2: memref<64x128xbf16, #tpu.memory_space<vmem>>, %arg3: memref<1x128xf32, #tpu.memory_space<vmem>>, %arg4: memref<8x128xbf16, #tpu.memory_space<vmem>>) attributes {dimension_semantics = [#tpu.dimension_semantics<parallel>], iteration_bounds = array<i64: 1>, scalar_prefetch = 0 : i64, scratch_operands = 0 : i64, tpu.core_type = #tpu.core_type<tc>, window_params = [{transform_indices = @transform_0, window_bounds = array<i64: 8, 64>}, {pipeline_mode = #tpu.pipeline_mode<synchronous>, transform_indices = @transform_1, window_bounds = array<i64: 64, 128>}, {pipeline_mode = #tpu.pipeline_mode<synchronous>, transform_indices = @transform_2, window_bounds = array<i64: 1, 128>}, {transform_indices = @transform_3, window_bounds = array<i64: 8, 128>}]} {
    %c0 = arith.constant 0 : index
    %c0_0 = arith.constant 0 : index
    %0 = vector.load %arg1[%c0, %c0_0] : memref<8x64xf32, #tpu.memory_space<vmem>>, vector<8x64xf32>
    %1 = arith.truncf %0 : vector<8x64xf32> to vector<8x64xbf16>
    %c0_1 = arith.constant 0 : index
    %c0_2 = arith.constant 0 : index
    %2 = vector.load %arg2[%c0_1, %c0_2] : memref<64x128xbf16, #tpu.memory_space<vmem>>, vector<64x128xbf16>
    %cst = arith.constant dense<0.000000e+00> : vector<8x128xf32>
    %3 = tpu.matmul %1, %2, %cst {dimension_numbers = #tpu.dot_dimension_numbers<[1], [0], [0], [1], [0, 0, 1, 1], [], []>} : vector<8x64xbf16>, vector<64x128xbf16>, vector<8x128xf32> -> vector<8x128xf32>
    %c0_3 = arith.constant 0 : index
    %c0_4 = arith.constant 0 : index
    %4 = vector.load %arg3[%c0_3, %c0_4] : memref<1x128xf32, #tpu.memory_space<vmem>>, vector<1x128xf32>
    %5 = vector.broadcast %4 : vector<1x128xf32> to vector<8x128xf32>
    %6 = arith.addf %3, %5 : vector<8x128xf32>
    %7 = arith.truncf %6 : vector<8x128xf32> to vector<8x128xbf16>
    %c0_5 = arith.constant 0 : index
    %c0_6 = arith.constant 0 : index
    %8 = vector.load %arg4[%c0_5, %c0_6] : memref<8x128xbf16, #tpu.memory_space<vmem>>, vector<8x128xbf16>
    tpu.vector_store %arg4[%c0_5, %c0_6], %7 {strides = array<i32>} : memref<8x128xbf16, #tpu.memory_space<vmem>>, vector<8x128xbf16>,
    return
  }
  func.func @transform_0(%arg0: i32) -> (i32, i32) {
    %c0_i32 = arith.constant 0 : i32
    %c0_i32_0 = arith.constant 0 : i32
    return %arg0, %c0_i32 : i32, i32
  }
  func.func @transform_1(%arg0: i32) -> (i32, i32) {
    %c0_i32 = arith.constant 0 : i32
    %c0_i32_0 = arith.constant 0 : i32
    %c0_i32_1 = arith.constant 0 : i32
    return %c0_i32, %c0_i32_0 : i32, i32
  }
  func.func @transform_2(%arg0: i32) -> (i32, i32) {
    %c0_i32 = arith.constant 0 : i32
    %c0_i32_0 = arith.constant 0 : i32
    %c0_i32_1 = arith.constant 0 : i32
    return %c0_i32, %c0_i32_0 : i32, i32
  }
  func.func @transform_3(%arg0: i32) -> (i32, i32) {
    %c0_i32 = arith.constant 0 : i32
    %c0_i32_0 = arith.constant 0 : i32
    return %arg0, %c0_i32 : i32, i32
  }
}

</mosaic_0001>

<llo_original>
// kernel: tpu_custom_call.1
$region0: #{tpu_custom_call.1}
  #allocation0 [shape = 'u32[]', space=smem, size = 0x4, offset = 0x4, fixed_abs, tag = 'smem constant byte address 0x4 - core index']
  #allocation1 [shape = 'u32[144,128]{1,0:T(1,128)}', space=vmem, size = 0x12000, scoped, tag = 'internal scratch']
  %s0 = inlined_call_operand.hbm [shape: f32[8,64], index: 0, kind: input, shape index: {}]
  %s1 = inlined_call_operand.hbm [shape: bf16[64,128], index: 1, kind: input, shape index: {}]
  %s2 = inlined_call_operand.vmem [shape: f32[1,128], index: 2, kind: input, shape index: {}]
  %s3 = inlined_call_operand.hbm [shape: bf16[8,128], index: 3, kind: output, shape index: {}]
  %s4 = sld [smem:[#allocation0]]
  $region30: #{tpu_custom_call.1} parent=0
    _
  %s6 = ssub.s32 1, %s4
  %s7 = scalar_select 0, %s6, %s4
  $region1: #{tpu_custom_call.1} parent=0
    #allocation2 [shape = 'u8[4096]{0}', space=vmem, size = 0x1000, scoped, tag = 'input window, operand 0, single buffered']
    #allocation3 [shape = 's32[1]{0}', space=sflag, size = 0x4, scoped, tag = 'scoped memory for tpu_custom_call.1']
    #allocation4 [shape = 's32[1]{0}', space=sflag, size = 0x4, scoped, tag = 'scoped memory for tpu_custom_call.1']
    #allocation5 [shape = 'u8[16384]{0}', space=vmem, size = 0x4000, scoped, tag = 'input window, operand 1, single buffered']
    #allocation6 [shape = 's32[1]{0}', space=sflag, size = 0x4, scoped, tag = 'scoped memory for tpu_custom_call.1']
    #allocation7 [shape = 'u8[2048]{0}', space=vmem, size = 0x800, scoped, tag = 'output window, operand 0, single buffered']
    %8 = vsyncpa [#allocation3], 0
    %9 = vsyncpa [#allocation6], 0
    %10 = vsyncpa [#allocation4], 0
    // Predicated region
    $region2: #{tpu_custom_call.1} parent=1 // pred_check
      _
    $region3: #{tpu_custom_call.1} parent=1 // pred_check_branch
      %12 = sbr.rel (0) target = $region5
    $region4: #{tpu_custom_call.1} parent=1 // pred_region
      %s14 = ssub.s32 128, 128
      %15 = vsyncadd [#allocation3], %s14
      %s17 = sshll.u32 [#allocation2], 4
      %s18 = int_to_ptr.vmem [resolvable:$true] %s17
      %20 = dma.hbm_to_vmem [thread:$0]  %s0, 128, %s18, [#allocation3]
    $region5: #{tpu_custom_call.1} parent=1 // pred_fallthru
      _
    // Predicated region
    $region6: #{tpu_custom_call.1} parent=1 // pred_check
      _
    $region7: #{tpu_custom_call.1} parent=1 // pred_check_branch
      %22 = sbr.rel (0) target = $region9
    $region8: #{tpu_custom_call.1} parent=1 // pred_region
      %s24 = ssub.s32 512, 512
      %25 = vsyncadd [#allocation6], %s24
      %s26 = sshll.u32 [#allocation5], 4
      %s27 = int_to_ptr.vmem [resolvable:$true] %s26
      %32 = dma.hbm_to_vmem [thread:$0]  %s1, 512, %s27, [#allocation6], 64, 64, 4
    $region9: #{tpu_custom_call.1} parent=1 // pred_fallthru
      _
    // Predicated region
    $region10: #{tpu_custom_call.1} parent=1 // pred_check
      _
    $region11: #{tpu_custom_call.1} parent=1 // pred_check_branch
      %34 = sbr.rel (0) target = $region13
    $region12: #{tpu_custom_call.1} parent=1 // pred_region
      _
    $region13: #{tpu_custom_call.1} parent=1 // pred_fallthru
      _
    // Predicated region
    $region14: #{tpu_custom_call.1} parent=1 // pred_check
      _
    $region15: #{tpu_custom_call.1} parent=1 // pred_check_branch
      %36 = sbr.rel (0) target = $region17
    $region16: #{tpu_custom_call.1} parent=1 // pred_region
      %37 = dma.done [#allocation3], 128
    $region17: #{tpu_custom_call.1} parent=1 // pred_fallthru
      _
    // Predicated region
    $region18: #{tpu_custom_call.1} parent=1 // pred_check
      _
    $region19: #{tpu_custom_call.1} parent=1 // pred_check_branch
      %39 = sbr.rel (0) target = $region21
    $region20: #{tpu_custom_call.1} parent=1 // pred_region
      %40 = dma.done [#allocation6], 512
    $region21: #{tpu_custom_call.1} parent=1 // pred_fallthru
      _
    %v42 = vld [vmem:[#allocation2] sm:$0xff]
    %v43 = vpack.c.bf16 %v42, %v42
    %v44 = vld [vmem:[#allocation5] sm:$0xf]
    %v45 = vld [vmem:[#allocation5 + $0x4] sm:$0xf]
    %v46 = vld [vmem:[#allocation5 + $0x8] sm:$0xf]
    %v47 = vld [vmem:[#allocation5 + $0xc] sm:$0xf]
    %v48 = vld [vmem:[#allocation5 + $0x10] sm:$0xf]
    %v49 = vld [vmem:[#allocation5 + $0x14] sm:$0xf]
    %v50 = vld [vmem:[#allocation5 + $0x18] sm:$0xf]
    %v51 = vld [vmem:[#allocation5 + $0x1c] sm:$0xf]
    %v52 = vld [vmem:[%s2] sm:$0x1]
    %v54 = vlaneseq
    %v55 = vshrl.u32 %v54, 7
    %v56 = vsub.s32 0, %v55
    %v57 = vrot.slane %v52, %v56
    %v67 = vunpack.c.l.b16 %v44
    %v68 = vunpack.c.l.b16 %v45
    %v69 = vunpack.c.l.b16 %v46
    %v70 = vunpack.c.l.b16 %v47
    %v71 = vunpack.c.l.b16 %v48
    %v72 = vunpack.c.l.b16 %v49
    %v73 = vunpack.c.l.b16 %v50
    %v74 = vunpack.c.l.b16 %v51
    %v75 = vpack.c.b16 %v68, %v67
    %v76 = vpack.c.b16 %v70, %v69
    %v77 = vpack.c.b16 %v72, %v71
    %v78 = vpack.c.b16 %v74, %v73
    %vm83 = vcmask 523264
    %v85 = vsel %vm83, %v43, 0
    %87 = vmatprep.subr.bf16.mxu0 0
    %88 = vmatpush1.bf16.msra.mxu0 0
    %89 = vmatprep.subr.bf16.mxu0 0
    %90 = vmatpush1.bf16.msra.mxu0 0
    %91 = vmatprep.subr.bf16.mxu0 0
    %92 = vmatpush1.bf16.msra.mxu0 0
    %93 = vmatprep.subr.bf16.mxu0 0
    %94 = vmatpush1.bf16.msra.mxu0 0
    %95 = vmatprep.subr.bf16.mxu0 0
    %96 = vmatpush1.bf16.msra.mxu0 %v78
    %97 = vmatprep.subr.bf16.mxu0 0
    %98 = vmatpush1.bf16.msra.mxu0 %v77
    %99 = vmatprep.subr.bf16.mxu0 0
    %100 = vmatpush1.bf16.msra.mxu0 %v76
    %101 = vmatprep.subr.bf16.mxu0 0
    %102 = vmatpush1.bf16.msra.mxu0 %v75
    %103 = vmatprep.subr.bf16.mxu0 0
    %104 = vmatpush2.bf16.msra.mxu0 0
    %105 = vmatprep.subr.bf16.mxu0 0
    %106 = vmatpush2.bf16.msra.mxu0 0
    %107 = vmatprep.subr.bf16.mxu0 0
    %108 = vmatpush2.bf16.msra.mxu0 0
    %109 = vmatprep.subr.bf16.mxu0 0
    %110 = vmatpush2.bf16.msra.mxu0 0
    %111 = vmatprep.subr.bf16.mxu0 0
    %112 = vmatpush2.bf16.msra.mxu0 0
    %113 = vmatprep.subr.bf16.mxu0 0
    %114 = vmatpush2.bf16.msra.mxu0 0
    %115 = vmatprep.subr.bf16.mxu0 0
    %116 = vmatpush2.bf16.msra.mxu0 0
    %117 = vmatprep.subr.bf16.mxu0 0
    %118 = vmatpush2.bf16.msra.mxu0 0
    %119 = vmatprep.mubr.bf16.mxu0 0
    %120 = vmatmul.mubr.bf16.gmra.mxu0 %v85
    %v121 = vpop.f32.mrf.mxu0
    %v122 = vadd.f32 %v57, %v121
    %v123 = vpop.f32.mrf.mxu0
    %v124 = vpop.f32.mrf.mxu0
    %v125 = vpop.f32.mrf.mxu0
    %126 = vdwg.mxu0
    %v127 = vpack.c.bf16 %v122, %v122
    %128 = vst [vmem:[#allocation7] sm:$0xf] %v127
    // Predicated region
    $region22: #{tpu_custom_call.1} parent=1 // pred_check
      _
    $region23: #{tpu_custom_call.1} parent=1 // pred_check_branch
      %130 = sbr.rel (0) target = $region25
    $region24: #{tpu_custom_call.1} parent=1 // pred_region
      %s132 = ssub.s32 64, 64
      %133 = vsyncadd [#allocation4], %s132
      %s135 = sshll.u32 [#allocation7], 4
      %s136 = int_to_ptr.vmem [resolvable:$true] %s135
      %138 = dma.vmem_to_hbm [thread:$0]  %s136, 64, %s3, [#allocation4]
    $region25: #{tpu_custom_call.1} parent=1 // pred_fallthru
      _
    // Predicated region
    $region26: #{tpu_custom_call.1} parent=1 // pred_check
      _
    $region27: #{tpu_custom_call.1} parent=1 // pred_check_branch
      %140 = sbr.rel (0) target = $region29
    $region28: #{tpu_custom_call.1} parent=1 // pred_region
      %141 = dma.done [#allocation4], 64
    $region29: #{tpu_custom_call.1} parent=1 // pred_fallthru
      _
    %142 = vsyncpa [#allocation3], 1
    %143 = vsyncpa [#allocation6], 1
    %144 = vsyncpa [#allocation4], 1

</llo_original>
